<compile_context>
chip_gen: v5e
topology: v5e:2x2
jax: 0.10.0
libtpu: 0.0.40
codegen_flags: <defaults>
</compile_context>

<pallas_src>
import functools

import jax
import jax.numpy as jnp
from jax import lax
from jax.experimental import pallas as pl
from jax.experimental.pallas import tpu as pltpu


def _layer_norm(h, gamma, beta, eps=1e-5):
    mean = jnp.mean(h, axis=-1, keepdims=True)
    var = jnp.mean((h - mean) ** 2, axis=-1, keepdims=True)
    return (h - mean) * lax.rsqrt(var + eps) * gamma + beta


# --------------------- Pass 1: full-width QKV projection ----------------------
def _qkv_proj_kernel(x_ref, w_ref, b_ref, q_ref, k_ref, v_ref,
                     *, d_model, scale, compute_dtype):
    x = x_ref[0].astype(compute_dtype)                        # (Tp, D)
    qkv = jnp.dot(x, w_ref[...], preferred_element_type=jnp.float32) + b_ref[...]
    D = d_model
    q_ref[0] = (qkv[:, :D] * scale).astype(q_ref.dtype)       # pre-scaled queries
    k_ref[0] = qkv[:, D:2 * D].astype(k_ref.dtype)
    v_ref[0] = qkv[:, 2 * D:].astype(v_ref.dtype)


# ------------- Pass 2: attention + out-proj + LN1 + FFN + LN2 -----------------
def _encoder_core_kernel(
    x_ref, q_ref, k_ref, v_ref,
    wo_ref, bo_ref, g1_ref, beta1_ref,
    w1_ref, b1_ref, w2_ref, b2_ref,
    g2_ref, beta2_ref,
    o_ref,
    ctx_ref,                      # VMEM scratch (tile_s, D), compute dtype
    *, num_heads, head_dim, compute_dtype, approx_recip,
):
    cd = compute_dtype
    x_tile = x_ref[0]             # (T, D) f32  residual
    q_tile = q_ref[0]             # (T, D) cd   pre-scaled queries
    k_full = k_ref[0]             # (S, D) cd
    v_full = v_ref[0]             # (S, D) cd

    # mask=False in the reference -> no attention mask.
    # TODO(synk): for very large num_heads / S, switch to a head-major
    # (H, S, hd) layout + lax.fori_loop (and a KV-tile axis with online
    # softmax) to bound live ranges; the per-head scratch store below keeps a
    # single head's (T, S) buffers live at a time for typical head counts.
    for h in range(num_heads):
        lo = h * head_dim
        hi = lo + head_dim
        qh = q_tile[:, lo:hi]                                  # (T, hd)
        kh = k_full[:, lo:hi]                                  # (S, hd)
        vh = v_full[:, lo:hi]                                  # (S, hd)

        s = lax.dot_general(                                   # (T, S), f32 acc
            qh, kh, dimension_numbers=(((1,), (1,)), ((), ())),
            preferred_element_type=jnp.float32)
        s = s - jnp.max(s, axis=-1, keepdims=True)
        p = jnp.exp(s)
        inv = pl.reciprocal(jnp.sum(p, axis=-1, keepdims=True), approx=approx_recip)

        # Normalize AFTER attn@V ((T,hd) scaling instead of (T,S)).
        ctx = jnp.dot(p.astype(cd), vh, preferred_element_type=jnp.float32) * inv
        ctx_ref[:, lo:hi] = ctx.astype(ctx_ref.dtype)          # materialize head

    # Single full-width output projection: contraction D, not head_dim.
    attn = jnp.dot(ctx_ref[...], wo_ref[...],
                   preferred_element_type=jnp.float32) + bo_ref[...]

    # dropout1 -> identity ; residual + norm1 (f32)
    h1 = _layer_norm(attn + x_tile, g1_ref[...], beta1_ref[...])

    # Position-wise feed forward (inner dropout -> identity)
    f = jnp.dot(h1.astype(cd), w1_ref[...], preferred_element_type=jnp.float32) + b1_ref[...]
    f = jnp.maximum(f, 0.0)
    f = jnp.dot(f.astype(cd), w2_ref[...], preferred_element_type=jnp.float32) + b2_ref[...]

    # dropout2 -> identity ; residual + norm2
    y = _layer_norm(f + h1, g2_ref[...], beta2_ref[...])
    o_ref[0] = y.astype(o_ref.dtype)


# ----------------------------- host-side helpers ------------------------------
def _largest_divisor_tile(S, cap):
    for cand in (1024, 512, 256, 128, 64, 32, 16, 8):
        if cand <= cap and S % cand == 0:
            return cand
    return S


def _auto_tile_s(S, score_budget_bytes=4 << 20):
    # Budget the (tile_s, S) f32 score matrix + its exp'd copy so long
    # sequences don't blow VMEM (e.g. S=4096 -> tile_s=128).
    # TODO(synk): flash-style KV-tile axis + online softmax for S >> 4k.
    cap = max(8, score_budget_bytes // (8 * S))
    return _largest_divisor_tile(S, cap)


def _auto_tile_p(S):
    return _largest_divisor_tile(S, 1024)


def _vmem_limit_bytes():
    # Per-generation scoped-VMEM limit: ~3/4 of physical, capped at 96 MiB
    # (=> ~96 MiB on v5e/v6e's 128 MiB, ~48 MiB on v7x's 64 MiB per-TC VMEM).
    cap = 128 << 20
    try:
        cap = int(getattr(pltpu.get_tpu_info(), "vmem_capacity_bytes", cap))
    except Exception:
        pass
    return int(min(96 << 20, cap * 3 // 4))


def _resident_spec(shape, single_buffer):
    # Grid-invariant block: fetched once, revisited across the whole grid.
    index_map = lambda b, t: (0,) * len(shape)
    if single_buffer:
        try:
            return pl.BlockSpec(shape, index_map, pipeline_mode=pl.Buffered(1))
        except (TypeError, AttributeError):
            pass  # older jax: fall back to default double buffering
    return pl.BlockSpec(shape, index_map)


def _relayout_qkv(params, num_heads, compute_dtype):
    """Re-layout the per-head interleaved [q_h|k_h|v_h] qkv columns into a
    head-concatenated [Q | K | V] (D, 3D) block for one full-width matmul."""
    D = params["wo"].shape[0]
    hd = D // num_heads
    wqkv, bqkv = params["wqkv"], params["bqkv"]

    def gather(which):  # which: 0 -> q, 1 -> k, 2 -> v
        w_cols = [wqkv[:, h * 3 * hd + which * hd: h * 3 * hd + (which + 1) * hd]
                  for h in range(num_heads)]
        b_cols = [bqkv[:, h * 3 * hd + which * hd: h * 3 * hd + (which + 1) * hd]
                  for h in range(num_heads)]
        return jnp.concatenate(w_cols, axis=1), jnp.concatenate(b_cols, axis=1)

    wq, bq = gather(0)
    wk, bk = gather(1)
    wv, bv = gather(2)
    w_cat = jnp.concatenate([wq, wk, wv], axis=1).astype(compute_dtype)  # (D, 3D)
    b_cat = jnp.concatenate([bq, bk, bv], axis=1)                        # (1, 3D) f32
    return w_cat, b_cat


# --------------------------------- wrapper ------------------------------------
def encoder_layer(x, params, *, num_heads, compute_dtype=jnp.float32,
                  tile_s=None, single_buffer_weights=True):
    B, S, D = x.shape
    assert D % num_heads == 0
    head_dim = D // num_heads
    Hf = params["w1"].shape[1]

    if tile_s is None:
        tile_s = _auto_tile_s(S)
    assert S % tile_s == 0 and (tile_s % 8 == 0 or tile_s == S)
    tile_p = _auto_tile_p(S)

    cd = jnp.dtype(compute_dtype)
    cdb = cd.itemsize
    approx_recip = cd == jnp.dtype(jnp.bfloat16)   # exact divide on the f32 path
    scale = float(head_dim) ** -0.5
    vmem_limit = _vmem_limit_bytes()

    # ----------------------- Pass 1: QKV projection --------------------------
    w_cat, b_cat = _relayout_qkv(params, num_heads, cd)

    qkv_flops = int(2 * B * S * D * 3 * D)
    qkv_bytes = int(B * S * D * 4                      # x in
                    + w_cat.size * cdb + b_cat.size * 4
                    + 3 * B * S * D * cdb)             # q, k, v out

    q, k, v = pl.pallas_call(
        functools.partial(_qkv_proj_kernel, d_model=D, scale=scale, compute_dtype=cd),
        out_shape=(jax.ShapeDtypeStruct((B, S, D), cd),) * 3,
        grid=(B, S // tile_p),
        in_specs=[
            pl.BlockSpec((1, tile_p, D), lambda b, t: (b, t, 0)),
            _resident_spec(w_cat.shape, single_buffer_weights),
            _resident_spec(b_cat.shape, single_buffer_weights),
        ],
        out_specs=[pl.BlockSpec((1, tile_p, D), lambda b, t: (b, t, 0))] * 3,
        compiler_params=pltpu.CompilerParams(
            dimension_semantics=("parallel", "parallel"),
            vmem_limit_bytes=vmem_limit,
        ),
        cost_estimate=pl.CostEstimate(
            flops=qkv_flops, transcendentals=0, bytes_accessed=qkv_bytes),
    )(x, w_cat, b_cat)

    # ----------------- Pass 2: fused encoder-layer core ----------------------
    wo = params["wo"].astype(cd)
    w1 = params["w1"].astype(cd)
    w2 = params["w2"].astype(cd)

    weight_args = (
        wo, params["bo"],
        params["gamma1"], params["beta1"],
        w1, params["b1"], w2, params["b2"],
        params["gamma2"], params["beta2"],
    )
    # TODO(synk): for very large D*ffn_hidden on v7x, keep w1/w2 in
    # memory_space=pl.ANY and stream them over a K-tile loop instead of
    # keeping them VMEM-resident.
    weight_specs = [_resident_spec(w.shape, single_buffer_weights) for w in weight_args]

    core_flops = int(4 * B * S * S * D        # scores + attn@V over all heads
                     + 2 * B * S * D * D      # output projection
                     + 4 * B * S * D * Hf)    # FFN
    core_trans = int(B * num_heads * S * S)
    core_bytes = int(
        B * S * D * 4                          # x residual
        + 3 * B * S * D * cdb                  # q, k, v
        + sum(int(w.size) * w.dtype.itemsize for w in weight_args)
        + B * S * D * 4                        # output
    )

    kernel = functools.partial(
        _encoder_core_kernel,
        num_heads=num_heads, head_dim=head_dim,
        compute_dtype=cd, approx_recip=approx_recip,
    )

    return pl.pallas_call(
        kernel,
        out_shape=jax.ShapeDtypeStruct((B, S, D), x.dtype),
        grid=(B, S // tile_s),
        in_specs=[
            pl.BlockSpec((1, tile_s, D), lambda b, qi: (b, qi, 0)),  # x residual tile
            pl.BlockSpec((1, tile_s, D), lambda b, qi: (b, qi, 0)),  # q tile
            pl.BlockSpec((1, S, D), lambda b, qi: (b, 0, 0)),        # K (per batch)
            pl.BlockSpec((1, S, D), lambda b, qi: (b, 0, 0)),        # V (per batch)
        ] + weight_specs,
        out_specs=pl.BlockSpec((1, tile_s, D), lambda b, qi: (b, qi, 0)),
        scratch_shapes=[pltpu.VMEM((tile_s, D), cd)],
        compiler_params=pltpu.CompilerParams(
            dimension_semantics=("parallel", "parallel"),
            vmem_limit_bytes=vmem_limit,
        ),
        cost_estimate=pl.CostEstimate(
            flops=core_flops, transcendentals=core_trans, bytes_accessed=core_bytes),
    )(x, q, k, v, *weight_args)


# ----------------------------- pure-JAX reference -----------------------------
def encoder_layer_ref(x, params, *, num_heads):
    B, S, D = x.shape
    hd = D // num_heads
    qkv = x @ params["wqkv"] + params["bqkv"]                     # (B, S, 3D)
    outs = []
    for h in range(num_heads):
        base = h * 3 * hd
        q = qkv[..., base: base + hd]
        k = qkv[..., base + hd: base + 2 * hd]
        v = qkv[..., base + 2 * hd: base + 3 * hd]
        s = jnp.einsum("bqd,bkd->bqk", q, k) / jnp.sqrt(jnp.float32(hd))
        a = jax.nn.softmax(s, axis=-1)
        outs.append(jnp.einsum("bqk,bkd->bqd", a, v))
    vals = jnp.concatenate(outs, axis=-1)
    attn_out = vals @ params["wo"] + params["bo"]

    def ln(h, g, b, eps=1e-5):
        m = jnp.mean(h, -1, keepdims=True)
        v = jnp.mean((h - m) ** 2, -1, keepdims=True)
        return g * (h - m) / jnp.sqrt(v + eps) + b

    h1 = ln(attn_out + x, params["gamma1"], params["beta1"])
    f = jnp.maximum(h1 @ params["w1"] + params["b1"], 0.0)
    f = f @ params["w2"] + params["b2"]
    return ln(f + h1, params["gamma2"], params["beta2"])


def init_params(key, d_model, ffn_hidden):
    ks = jax.random.split(key, 8)

    def w(k, shape, scale=0.1):
        return (scale * jax.random.normal(k, shape)).astype(jnp.float32)

    return {
        # qkv_layer: Linear(d_model, 3*d_model)  (stored as (in, out))
        "wqkv": w(ks[0], (d_model, 3 * d_model)),
        "bqkv": w(ks[1], (1, 3 * d_model)),
        # linear_layer: Linear(d_model, d_model)
        "wo": w(ks[2], (d_model, d_model)),
        "bo": w(ks[3], (1, d_model)),
        # norm1
        "gamma1": jnp.ones((1, d_model), jnp.float32),
        "beta1": jnp.zeros((1, d_model), jnp.float32),
        # ffn
        "w1": w(ks[4], (d_model, ffn_hidden)),
        "b1": w(ks[5], (1, ffn_hidden)),
        "w2": w(ks[6], (ffn_hidden, d_model)),
        "b2": w(ks[7], (1, d_model)),
        # norm2
        "gamma2": jnp.ones((1, d_model), jnp.float32),
        "beta2": jnp.zeros((1, d_model), jnp.float32),
    }


if __name__ == "__main__":
    B, S, D = 2, 8, 32          # batch, seq, d_model
    NUM_HEADS = 4
    FFN_HIDDEN = 64

    key = jax.random.PRNGKey(0)
    kx, kp = jax.random.split(key)
    x = jax.random.normal(kx, (B, S, D), dtype=jnp.float32)
    params = init_params(kp, D, FFN_HIDDEN)

    ref = encoder_layer_ref(x, params, num_heads=NUM_HEADS)

    # Exact-precision path (f32 everywhere, exact reciprocal).  Fall back to
    # default double-buffered weight blocks if this jax build rejects
    # single-buffered (pl.Buffered(1)) weight specs at lowering time.
    try:
        out = jax.block_until_ready(encoder_layer(x, params, num_heads=NUM_HEADS))
        sb = True
    except Exception:
        sb = False
        out = jax.block_until_ready(
            encoder_layer(x, params, num_heads=NUM_HEADS, single_buffer_weights=False))

    assert out.shape == (B, S, D)
    assert jnp.allclose(out, ref, atol=1e-4, rtol=1e-4), (
        f"f32 max err {jnp.max(jnp.abs(out - ref))}"
    )

    # Fast path: bf16 MXU operands (weights + Q/K/V), f32 accumulation and f32
    # softmax/LayerNorm, EUP approx reciprocal.  Matches torch/f32 only to
    # ~1e-1 (bf16 rounding) — expected.
    out_bf16 = jax.block_until_ready(
        encoder_layer(x, params, num_heads=NUM_HEADS,
                      compute_dtype=jnp.bfloat16, single_buffer_weights=sb)
    )
    assert jnp.allclose(out_bf16, ref, atol=1e-1, rtol=1e-1), (
        f"bf16 max err {jnp.max(jnp.abs(out_bf16 - ref))}"
    )

    print("KERNEL_OK")
</pallas_src>

<mosaic_0001>
module attributes {stable_mosaic.version = 11 : i64} {
  func.func @_qkv_proj_kernel(%arg0: i32, %arg1: i32, %arg2: memref<1x8x32xf32, #tpu.memory_space<vmem>>, %arg3: memref<32x96xf32, #tpu.memory_space<vmem>>, %arg4: memref<1x96xf32, #tpu.memory_space<vmem>>, %arg5: memref<1x8x32xf32, #tpu.memory_space<vmem>>, %arg6: memref<1x8x32xf32, #tpu.memory_space<vmem>>, %arg7: memref<1x8x32xf32, #tpu.memory_space<vmem>>) attributes {dimension_semantics = [#tpu.dimension_semantics<parallel>, #tpu.dimension_semantics<parallel>], iteration_bounds = array<i64: 2, 1>, scalar_prefetch = 0 : i64, scratch_operands = 0 : i64, tpu.core_type = #tpu.core_type<tc>, window_params = [{transform_indices = @transform_0, window_bounds = array<i64: 1, 8, 32>}, {pipeline_mode = #tpu.pipeline_mode<synchronous>, transform_indices = @transform_1, window_bounds = array<i64: 32, 96>}, {pipeline_mode = #tpu.pipeline_mode<synchronous>, transform_indices = @transform_2, window_bounds = array<i64: 1, 96>}, {transform_indices = @transform_3, window_bounds = array<i64: 1, 8, 32>}, {transform_indices = @transform_4, window_bounds = array<i64: 1, 8, 32>}, {transform_indices = @transform_5, window_bounds = array<i64: 1, 8, 32>}]} {
    %c0 = arith.constant 0 : index
    %c0_0 = arith.constant 0 : index
    %c0_1 = arith.constant 0 : index
    %0 = vector.load %arg2[%c0, %c0_0, %c0_1] : memref<1x8x32xf32, #tpu.memory_space<vmem>>, vector<1x8x32xf32>
    %1 = vector.shape_cast %0 : vector<1x8x32xf32> to vector<8x32xf32>
    %c0_2 = arith.constant 0 : index
    %c0_3 = arith.constant 0 : index
    %2 = vector.load %arg3[%c0_2, %c0_3] : memref<32x96xf32, #tpu.memory_space<vmem>>, vector<32x96xf32>
    %cst = arith.constant dense<0.000000e+00> : vector<8x96xf32>
    %3 = tpu.matmul %1, %2, %cst {dimension_numbers = #tpu.dot_dimension_numbers<[1], [0], [0], [1], [0, 0, 1, 1], [], []>} : vector<8x32xf32>, vector<32x96xf32>, vector<8x96xf32> -> vector<8x96xf32>
    %c0_4 = arith.constant 0 : index
    %c0_5 = arith.constant 0 : index
    %4 = vector.load %arg4[%c0_4, %c0_5] : memref<1x96xf32, #tpu.memory_space<vmem>>, vector<1x96xf32>
    %5 = vector.broadcast %4 : vector<1x96xf32> to vector<8x96xf32>
    %6 = arith.addf %3, %5 : vector<8x96xf32>
    %7 = vector.extract_strided_slice %6 {offsets = [0, 0], sizes = [8, 32], strides = [1, 1]} : vector<8x96xf32> to vector<8x32xf32>
    %cst_6 = arith.constant 0.353553385 : f32
    %8 = vector.broadcast %cst_6 : f32 to vector<8x32xf32>
    %9 = arith.mulf %7, %8 : vector<8x32xf32>
    %c0_7 = arith.constant 0 : index
    %c0_8 = arith.constant 0 : index
    %c0_9 = arith.constant 0 : index
    %10 = vector.load %arg5[%c0_7, %c0_8, %c0_9] : memref<1x8x32xf32, #tpu.memory_space<vmem>>, vector<1x8x32xf32>
    %11 = vector.shape_cast %10 : vector<1x8x32xf32> to vector<8x32xf32>
    %12 = vector.shape_cast %9 : vector<8x32xf32> to vector<1x8x32xf32>
    tpu.vector_store %arg5[%c0_7, %c0_8, %c0_9], %12 {strides = array<i32>} : memref<1x8x32xf32, #tpu.memory_space<vmem>>, vector<1x8x32xf32>,
    %13 = vector.extract_strided_slice %6 {offsets = [0, 32], sizes = [8, 32], strides = [1, 1]} : vector<8x96xf32> to vector<8x32xf32>
    %c0_10 = arith.constant 0 : index
    %c0_11 = arith.constant 0 : index
    %c0_12 = arith.constant 0 : index
    %14 = vector.load %arg6[%c0_10, %c0_11, %c0_12] : memref<1x8x32xf32, #tpu.memory_space<vmem>>, vector<1x8x32xf32>
    %15 = vector.shape_cast %14 : vector<1x8x32xf32> to vector<8x32xf32>
    %16 = vector.shape_cast %13 : vector<8x32xf32> to vector<1x8x32xf32>
    tpu.vector_store %arg6[%c0_10, %c0_11, %c0_12], %16 {strides = array<i32>} : memref<1x8x32xf32, #tpu.memory_space<vmem>>, vector<1x8x32xf32>,
    %17 = vector.extract_strided_slice %6 {offsets = [0, 64], sizes = [8, 32], strides = [1, 1]} : vector<8x96xf32> to vector<8x32xf32>
    %c0_13 = arith.constant 0 : index
    %c0_14 = arith.constant 0 : index
    %c0_15 = arith.constant 0 : index
    %18 = vector.load %arg7[%c0_13, %c0_14, %c0_15] : memref<1x8x32xf32, #tpu.memory_space<vmem>>, vector<1x8x32xf32>
    %19 = vector.shape_cast %18 : vector<1x8x32xf32> to vector<8x32xf32>
    %20 = vector.shape_cast %17 : vector<8x32xf32> to vector<1x8x32xf32>
    tpu.vector_store %arg7[%c0_13, %c0_14, %c0_15], %20 {strides = array<i32>} : memref<1x8x32xf32, #tpu.memory_space<vmem>>, vector<1x8x32xf32>,
    return
  }
  func.func @transform_0(%arg0: i32, %arg1: i32) -> (i32, i32, i32) {
    %c0_i32 = arith.constant 0 : i32
    %c0_i32_0 = arith.constant 0 : i32
    return %arg0, %arg1, %c0_i32 : i32, i32, i32
  }
  func.func @transform_1(%arg0: i32, %arg1: i32) -> (i32, i32) {
    %c0_i32 = arith.constant 0 : i32
    %c0_i32_0 = arith.constant 0 : i32
    %c0_i32_1 = arith.constant 0 : i32
    return %c0_i32, %c0_i32_0 : i32, i32
  }
  func.func @transform_2(%arg0: i32, %arg1: i32) -> (i32, i32) {
    %c0_i32 = arith.constant 0 : i32
    %c0_i32_0 = arith.constant 0 : i32
    %c0_i32_1 = arith.constant 0 : i32
    return %c0_i32, %c0_i32_0 : i32, i32
  }
  func.func @transform_3(%arg0: i32, %arg1: i32) -> (i32, i32, i32) {
    %c0_i32 = arith.constant 0 : i32
    %c0_i32_0 = arith.constant 0 : i32
    return %arg0, %arg1, %c0_i32 : i32, i32, i32
  }
  func.func @transform_4(%arg0: i32, %arg1: i32) -> (i32, i32, i32) {
    %c0_i32 = arith.constant 0 : i32
    %c0_i32_0 = arith.constant 0 : i32
    return %arg0, %arg1, %c0_i32 : i32, i32, i32
  }
  func.func @transform_5(%arg0: i32, %arg1: i32) -> (i32, i32, i32) {
    %c0_i32 = arith.constant 0 : i32
    %c0_i32_0 = arith.constant 0 : i32
    return %arg0, %arg1, %c0_i32 : i32, i32, i32
  }
}

module attributes {stable_mosaic.version = 11 : i64} {
  func.func @_qkv_proj_kernel(%arg0: i32, %arg1: i32, %arg2: memref<1x8x32xf32, #tpu.memory_space<vmem>>, %arg3: memref<32x96xf32, #tpu.memory_space<vmem>>, %arg4: memref<1x96xf32, #tpu.memory_space<vmem>>, %arg5: memref<1x8x32xf32, #tpu.memory_space<vmem>>, %arg6: memref<1x8x32xf32, #tpu.memory_space<vmem>>, %arg7: memref<1x8x32xf32, #tpu.memory_space<vmem>>) attributes {dimension_semantics = [#tpu.dimension_semantics<parallel>, #tpu.dimension_semantics<parallel>], iteration_bounds = array<i64: 2, 1>, scalar_prefetch = 0 : i64, scratch_operands = 0 : i64, tpu.core_type = #tpu.core_type<tc>, window_params = [{transform_indices = @transform_0, window_bounds = array<i64: 1, 8, 32>}, {pipeline_mode = #tpu.pipeline_mode<synchronous>, transform_indices = @transform_1, window_bounds = array<i64: 32, 96>}, {pipeline_mode = #tpu.pipeline_mode<synchronous>, transform_indices = @transform_2, window_bounds = array<i64: 1, 96>}, {transform_indices = @transform_3, window_bounds = array<i64: 1, 8, 32>}, {transform_indices = @transform_4, window_bounds = array<i64: 1, 8, 32>}, {transform_indices = @transform_5, window_bounds = array<i64: 1, 8, 32>}]} {
    %c0 = arith.constant 0 : index
    %c0_0 = arith.constant 0 : index
    %c0_1 = arith.constant 0 : index
    %0 = vector.load %arg2[%c0, %c0_0, %c0_1] : memref<1x8x32xf32, #tpu.memory_space<vmem>>, vector<1x8x32xf32>
    %1 = vector.shape_cast %0 : vector<1x8x32xf32> to vector<8x32xf32>
    %c0_2 = arith.constant 0 : index
    %c0_3 = arith.constant 0 : index
    %2 = vector.load %arg3[%c0_2, %c0_3] : memref<32x96xf32, #tpu.memory_space<vmem>>, vector<32x96xf32>
    %cst = arith.constant dense<0.000000e+00> : vector<8x96xf32>
    %3 = tpu.matmul %1, %2, %cst {dimension_numbers = #tpu.dot_dimension_numbers<[1], [0], [0], [1], [0, 0, 1, 1], [], []>} : vector<8x32xf32>, vector<32x96xf32>, vector<8x96xf32> -> vector<8x96xf32>
    %c0_4 = arith.constant 0 : index
    %c0_5 = arith.constant 0 : index
    %4 = vector.load %arg4[%c0_4, %c0_5] : memref<1x96xf32, #tpu.memory_space<vmem>>, vector<1x96xf32>
    %5 = vector.broadcast %4 : vector<1x96xf32> to vector<8x96xf32>
    %6 = arith.addf %3, %5 : vector<8x96xf32>
    %7 = vector.extract_strided_slice %6 {offsets = [0, 0], sizes = [8, 32], strides = [1, 1]} : vector<8x96xf32> to vector<8x32xf32>
    %cst_6 = arith.constant 0.353553385 : f32
    %8 = vector.broadcast %cst_6 : f32 to vector<8x32xf32>
    %9 = arith.mulf %7, %8 : vector<8x32xf32>
    %c0_7 = arith.constant 0 : index
    %c0_8 = arith.constant 0 : index
    %c0_9 = arith.constant 0 : index
    %10 = vector.load %arg5[%c0_7, %c0_8, %c0_9] : memref<1x8x32xf32, #tpu.memory_space<vmem>>, vector<1x8x32xf32>
    %11 = vector.shape_cast %10 : vector<1x8x32xf32> to vector<8x32xf32>
    %12 = vector.shape_cast %9 : vector<8x32xf32> to vector<1x8x32xf32>
    tpu.vector_store %arg5[%c0_7, %c0_8, %c0_9], %12 {strides = array<i32>} : memref<1x8x32xf32, #tpu.memory_space<vmem>>, vector<1x8x32xf32>,
    %13 = vector.extract_strided_slice %6 {offsets = [0, 32], sizes = [8, 32], strides = [1, 1]} : vector<8x96xf32> to vector<8x32xf32>
    %c0_10 = arith.constant 0 : index
    %c0_11 = arith.constant 0 : index
    %c0_12 = arith.constant 0 : index
    %14 = vector.load %arg6[%c0_10, %c0_11, %c0_12] : memref<1x8x32xf32, #tpu.memory_space<vmem>>, vector<1x8x32xf32>
    %15 = vector.shape_cast %14 : vector<1x8x32xf32> to vector<8x32xf32>
    %16 = vector.shape_cast %13 : vector<8x32xf32> to vector<1x8x32xf32>
    tpu.vector_store %arg6[%c0_10, %c0_11, %c0_12], %16 {strides = array<i32>} : memref<1x8x32xf32, #tpu.memory_space<vmem>>, vector<1x8x32xf32>,
    %17 = vector.extract_strided_slice %6 {offsets = [0, 64], sizes = [8, 32], strides = [1, 1]} : vector<8x96xf32> to vector<8x32xf32>
    %c0_13 = arith.constant 0 : index
    %c0_14 = arith.constant 0 : index
    %c0_15 = arith.constant 0 : index
    %18 = vector.load %arg7[%c0_13, %c0_14, %c0_15] : memref<1x8x32xf32, #tpu.memory_space<vmem>>, vector<1x8x32xf32>
    %19 = vector.shape_cast %18 : vector<1x8x32xf32> to vector<8x32xf32>
    %20 = vector.shape_cast %17 : vector<8x32xf32> to vector<1x8x32xf32>
    tpu.vector_store %arg7[%c0_13, %c0_14, %c0_15], %20 {strides = array<i32>} : memref<1x8x32xf32, #tpu.memory_space<vmem>>, vector<1x8x32xf32>,
    return
  }
  func.func @transform_0(%arg0: i32, %arg1: i32) -> (i32, i32, i32) {
    %c0_i32 = arith.constant 0 : i32
    %c0_i32_0 = arith.constant 0 : i32
    return %arg0, %arg1, %c0_i32 : i32, i32, i32
  }
  func.func @transform_1(%arg0: i32, %arg1: i32) -> (i32, i32) {
    %c0_i32 = arith.constant 0 : i32
    %c0_i32_0 = arith.constant 0 : i32
    %c0_i32_1 = arith.constant 0 : i32
    return %c0_i32, %c0_i32_0 : i32, i32
  }
  func.func @transform_2(%arg0: i32, %arg1: i32) -> (i32, i32) {
    %c0_i32 = arith.constant 0 : i32
    %c0_i32_0 = arith.constant 0 : i32
    %c0_i32_1 = arith.constant 0 : i32
    return %c0_i32, %c0_i32_0 : i32, i32
  }
  func.func @transform_3(%arg0: i32, %arg1: i32) -> (i32, i32, i32) {
    %c0_i32 = arith.constant 0 : i32
    %c0_i32_0 = arith.constant 0 : i32
    return %arg0, %arg1, %c0_i32 : i32, i32, i32
  }
  func.func @transform_4(%arg0: i32, %arg1: i32) -> (i32, i32, i32) {
    %c0_i32 = arith.constant 0 : i32
    %c0_i32_0 = arith.constant 0 : i32
    return %arg0, %arg1, %c0_i32 : i32, i32, i32
  }
  func.func @transform_5(%arg0: i32, %arg1: i32) -> (i32, i32, i32) {
    %c0_i32 = arith.constant 0 : i32
    %c0_i32_0 = arith.constant 0 : i32
    return %arg0, %arg1, %c0_i32 : i32, i32, i32
  }
}

</mosaic_0001>

<llo_original>
// kernel: tpu_custom_call.1
$region0: #{tpu_custom_call.1}
  #allocation0 [shape = 'u32[]', space=smem, size = 0x4, offset = 0x4, fixed_abs, tag = 'smem constant byte address 0x4 - core index']
  #allocation1 [shape = 'u32[72,128]{1,0:T(1,128)}', space=vmem, size = 0x9000, scoped, tag = 'internal scratch']
  %s0 = inlined_call_operand.hbm [shape: f32[2,8,32], index: 0, kind: input, shape index: {}]
  %s1 = inlined_call_operand.hbm [shape: f32[32,96], index: 1, kind: input, shape index: {}]
  %s2 = inlined_call_operand.vmem [shape: f32[1,96], index: 2, kind: input, shape index: {}]
  %s3 = inlined_call_operand.hbm [shape: f32[2,8,32], index: 3, kind: output, shape index: {0}]
  %s4 = inlined_call_operand.hbm [shape: f32[2,8,32], index: 4, kind: output, shape index: {1}]
  %s5 = inlined_call_operand.hbm [shape: f32[2,8,32], index: 5, kind: output, shape index: {2}]
  %6 = xla_tuple %s3, %s4, %s5
  %s7 = sld [smem:[#allocation0]]
  $region69: #{tpu_custom_call.1} parent=0
    _
  %s9 = ssub.s32 1, %s7
  %s10 = scalar_select 0, %s9, %s7
  $region1: #{tpu_custom_call.1} parent=0
    #allocation2 [shape = 'u8[8192]{0}', space=vmem, size = 0x2000, scoped, tag = 'input window, operand 0']
    #allocation3 [shape = 's32[2]{0}', space=sflag, size = 0x8, scoped, tag = 'scoped memory for tpu_custom_call.1']
    #allocation4 [shape = 's32[2]{0}', space=sflag, size = 0x8, scoped, tag = 'scoped memory for tpu_custom_call.1']
    #allocation5 [shape = 'u8[16384]{0}', space=vmem, size = 0x4000, scoped, tag = 'input window, operand 1, single buffered']
    #allocation6 [shape = 's32[1]{0}', space=sflag, size = 0x4, scoped, tag = 'scoped memory for tpu_custom_call.1']
    #allocation7 [shape = 'u8[8192]{0}', space=vmem, size = 0x2000, scoped, tag = 'output window, operand 0']
    #allocation8 [shape = 'u8[8192]{0}', space=vmem, size = 0x2000, scoped, tag = 'output window, operand 1']
    #allocation9 [shape = 's32[2]{0}', space=sflag, size = 0x8, scoped, tag = 'scoped memory for tpu_custom_call.1']
    #allocation10 [shape = 'u8[8192]{0}', space=vmem, size = 0x2000, scoped, tag = 'output window, operand 2']
    %11 = vsyncpa [#allocation3], 0
    %s12 = scalar_lea.sflag [#allocation3], 1
    %13 = vsyncpa %s12, 0
    %14 = vsyncpa [#allocation6], 0
    %15 = vsyncpa [#allocation4], 0
    %s16 = scalar_lea.sflag [#allocation4], 1
    %17 = vsyncpa %s16, 0
    %18 = vsyncpa [#allocation9], 0
    %s19 = scalar_lea.sflag [#allocation9], 1
    %20 = vsyncpa %s19, 0
    loop: start=0, step=1, limit=4
    $region2: #{tpu_custom_call.1} parent=1 // loop_pre_header
      _
    $region3: #{tpu_custom_call.1} parent=1 // loop_header
      %s22 = sphi 0, %s26
      %p23 = scmp.ge.s32.totalorder %s22, 4
      %s29 = sphi 0, %s41
      %s30 = sphi 0, %s37
      %s31 = sphi 0, %s29
      %s32 = sphi 0, %s30
      %s33 = sphi 0, %s31
      %s34 = sphi 0, %s32
      %s46 = sphi 0, %s48
      %s49 = sphi 0, %s46
      %s50 = sphi 0, %s49
      %s66 = sphi 0, %s50
      %s70 = sphi 0, %s70
      %s72 = sphi 0, %s70
      %s73 = sphi 0, %s72
      %s87 = sphi 0, %s73
      %s91 = sphi 0, %s91
      %s93 = sphi 0, %s91
      %s94 = sphi 0, %s93
      %s108 = sphi 0, %s94
      %s116 = sphi 0, %s118
      %s119 = sphi 0, %s116
      %s120 = sphi 0, %s119
      %s136 = sphi 0, %s120
      %s144 = sphi 0, %s146
      %s147 = sphi 0, %s144
      %s148 = sphi 0, %s147
      %s164 = sphi 0, %s148
      %s172 = sphi 0, %s174
      %s175 = sphi 0, %s172
      %s176 = sphi 0, %s175
      %s192 = sphi 0, %s176
    $region4: #{tpu_custom_call.1} parent=1 // loop_header_branch
      %25 = sbr.rel (%p23) target = $region8
    $region5: #{tpu_custom_call.1} parent=1 // loop_body
      %s27 = ssub.s32 %s22, 1
      %s28 = ssub.s32 %s22, 2
      %s35 = sadd.s32 1, %s30
      %p36 = scmp.ge.s32.totalorder %s35, 1
      %s37 = scalar_select %p36, 0, %s35
      %s38 = sadd.s32 1, %s29
      %s39 = scalar_select %p36, %s38, %s29
      %p40 = scmp.ge.s32.totalorder %s39, 2
      %s41 = scalar_select %p40, 0, %s39
      %s42 = ssub.s32 %s29, %s41
      %s43 = ssub.s32 %s30, %s37
      %s44 = sor.u32 %s42, %s43
      %p45 = scmp.eq.s32.totalorder %s44, 0
      %s47 = sadd.s32 %s46, 1
      %s48 = scalar_select %p45, %s46, %s47
      %p51 = pneg %p45
      %p52 = scmp.eq.s32.totalorder %s22, 1
      %p53 = por %p51, %p52
      %p54 = scmp.ne.s32.totalorder %s46, %s49
      %p55 = scmp.eq.s32.totalorder %s22, 0
      %p56 = por %p54, %p55
      %p57 = scmp.ne.s32.totalorder %s46, %s49
      %p58 = scmp.eq.s32.totalorder %s27, 1
      %p59 = por %p57, %p58
      %p60 = scmp.ne.s32.totalorder %s49, %s50
      %p61 = scmp.eq.s32.totalorder %s27, 0
      %p62 = por %p60, %p61
      %p63 = scmp.ne.s32.totalorder %s49, %s50
      %p64 = scmp.eq.s32.totalorder %s28, 1
      %p65 = por %p63, %p64
      %p67 = scmp.ne.s32.totalorder %s50, %s66
      %p68 = scmp.eq.s32.totalorder %s28, 0
      %p69 = por %p67, %p68
      %s71 = sadd.s32 %s70, 1
      %p74 = scmp.eq.s32.totalorder %s22, 1
      %p75 = scmp.ne.s32.totalorder %s70, %s72
      %p76 = scmp.eq.s32.totalorder %s22, 0
      %p77 = por %p75, %p76
      %p78 = scmp.ne.s32.totalorder %s70, %s72
      %p79 = scmp.eq.s32.totalorder %s27, 1
      %p80 = por %p78, %p79
      %p81 = scmp.ne.s32.totalorder %s72, %s73
      %p82 = scmp.eq.s32.totalorder %s27, 0
      %p83 = por %p81, %p82
      %p84 = scmp.ne.s32.totalorder %s72, %s73
      %p85 = scmp.eq.s32.totalorder %s28, 1
      %p86 = por %p84, %p85
      %p88 = scmp.ne.s32.totalorder %s73, %s87
      %p89 = scmp.eq.s32.totalorder %s28, 0
      %p90 = por %p88, %p89
      %s92 = sadd.s32 %s91, 1
      %p95 = scmp.eq.s32.totalorder %s22, 1
      %p96 = scmp.ne.s32.totalorder %s91, %s93
      %p97 = scmp.eq.s32.totalorder %s22, 0
      %p98 = por %p96, %p97
      %p99 = scmp.ne.s32.totalorder %s91, %s93
      %p100 = scmp.eq.s32.totalorder %s27, 1
      %p101 = por %p99, %p100
      %p102 = scmp.ne.s32.totalorder %s93, %s94
      %p103 = scmp.eq.s32.totalorder %s27, 0
      %p104 = por %p102, %p103
      %p105 = scmp.ne.s32.totalorder %s93, %s94
      %p106 = scmp.eq.s32.totalorder %s28, 1
      %p107 = por %p105, %p106
      %p109 = scmp.ne.s32.totalorder %s94, %s108
      %p110 = scmp.eq.s32.totalorder %s28, 0
      %p111 = por %p109, %p110
      %s112 = ssub.s32 %s29, %s41
      %s113 = ssub.s32 %s30, %s37
      %s114 = sor.u32 %s112, %s113
      %p115 = scmp.eq.s32.totalorder %s114, 0
      %s117 = sadd.s32 %s116, 1
      %s118 = scalar_select %p115, %s116, %s117
      %p121 = pneg %p115
      %p122 = scmp.eq.s32.totalorder %s22, 1
      %p123 = por %p121, %p122
      %p124 = scmp.ne.s32.totalorder %s116, %s119
      %p125 = scmp.eq.s32.totalorder %s22, 0
      %p126 = por %p124, %p125
      %p127 = scmp.ne.s32.totalorder %s116, %s119
      %p128 = scmp.eq.s32.totalorder %s27, 1
      %p129 = por %p127, %p128
      %p130 = scmp.ne.s32.totalorder %s119, %s120
      %p131 = scmp.eq.s32.totalorder %s27, 0
      %p132 = por %p130, %p131
      %p133 = scmp.ne.s32.totalorder %s119, %s120
      %p134 = scmp.eq.s32.totalorder %s28, 1
      %p135 = por %p133, %p134
      %p137 = scmp.ne.s32.totalorder %s120, %s136
      %p138 = scmp.eq.s32.totalorder %s28, 0
      %p139 = por %p137, %p138
      %s140 = ssub.s32 %s29, %s41
      %s141 = ssub.s32 %s30, %s37
      %s142 = sor.u32 %s140, %s141
      %p143 = scmp.eq.s32.totalorder %s142, 0
      %s145 = sadd.s32 %s144, 1
      %s146 = scalar_select %p143, %s144, %s145
      %p149 = pneg %p143
      %p150 = scmp.eq.s32.totalorder %s22, 1
      %p151 = por %p149, %p150
      %p152 = scmp.ne.s32.totalorder %s144, %s147
      %p153 = scmp.eq.s32.totalorder %s22, 0
      %p154 = por %p152, %p153
      %p155 = scmp.ne.s32.totalorder %s144, %s147
      %p156 = scmp.eq.s32.totalorder %s27, 1
      %p157 = por %p155, %p156
      %p158 = scmp.ne.s32.totalorder %s147, %s148
      %p159 = scmp.eq.s32.totalorder %s27, 0
      %p160 = por %p158, %p159
      %p161 = scmp.ne.s32.totalorder %s147, %s148
      %p162 = scmp.eq.s32.totalorder %s28, 1
      %p163 = por %p161, %p162
      %p165 = scmp.ne.s32.totalorder %s148, %s164
      %p166 = scmp.eq.s32.totalorder %s28, 0
      %p167 = por %p165, %p166
      %s168 = ssub.s32 %s29, %s41
      %s169 = ssub.s32 %s30, %s37
      %s170 = sor.u32 %s168, %s169
      %p171 = scmp.eq.s32.totalorder %s170, 0
      %s173 = sadd.s32 %s172, 1
      %s174 = scalar_select %p171, %s172, %s173
      %p177 = pneg %p171
      %p178 = scmp.eq.s32.totalorder %s22, 1
      %p179 = por %p177, %p178
      %p180 = scmp.ne.s32.totalorder %s172, %s175
      %p181 = scmp.eq.s32.totalorder %s22, 0
      %p182 = por %p180, %p181
      %p183 = scmp.ne.s32.totalorder %s172, %s175
      %p184 = scmp.eq.s32.totalorder %s27, 1
      %p185 = por %p183, %p184
      %p186 = scmp.ne.s32.totalorder %s175, %s176
      %p187 = scmp.eq.s32.totalorder %s27, 0
      %p188 = por %p186, %p187
      %p189 = scmp.ne.s32.totalorder %s175, %s176
      %p190 = scmp.eq.s32.totalorder %s28, 1
      %p191 = por %p189, %p190
      %p193 = scmp.ne.s32.totalorder %s176, %s192
      %p194 = scmp.eq.s32.totalorder %s28, 0
      %p195 = por %p193, %p194
      %p196 = scmp.le.s32.totalorder 1, %s22
      %p197 = scmp.lt.s32.totalorder %s22, 3
      %p198 = pnand %p196, %p197
      %p199 = pneg %p198
      // Predicated region
      $region9: #{tpu_custom_call.1} parent=5 // pred_check
        _
      $region10: #{tpu_custom_call.1} parent=5 // pred_check_branch
        %201 = sbr.rel (%p198) target = $region12
      $region11: #{tpu_custom_call.1} parent=5 // pred_region
        %s202 = ssub.s32 %s22, 1
        // Predicated region
        $region13: #{tpu_custom_call.1} parent=11 // pred_check
          %p203 = pneg %p83
        $region14: #{tpu_custom_call.1} parent=11 // pred_check_branch
          %205 = sbr.rel (%p203) target = $region16
        $region15: #{tpu_custom_call.1} parent=11 // pred_region
          %207 = vsyncadd [#allocation6], 0
          %s208 = sshll.u32 %s1, 4
          %s209 = int_to_ptr.hbm [resolvable:$true] %s208
          %s210 = sshll.u32 [#allocation5], 4
          %s211 = int_to_ptr.vmem [resolvable:$true] %s210
          %216 = dma.hbm_to_vmem [thread:$0]  %s209, 512, %s211, [#allocation6], 128, 128, 8
        $region16: #{tpu_custom_call.1} parent=11 // pred_fallthru
          _
        // Predicated region
        $region17: #{tpu_custom_call.1} parent=11 // pred_check
          %p217 = pneg %p104
        $region18: #{tpu_custom_call.1} parent=11 // pred_check_branch
          %219 = sbr.rel (%p217) target = $region20
        $region19: #{tpu_custom_call.1} parent=11 // pred_region
          _
        $region20: #{tpu_custom_call.1} parent=11 // pred_fallthru
          _
      $region12: #{tpu_custom_call.1} parent=5 // pred_fallthru
        _
      %p220 = scmp.lt.s32.totalorder %s22, 2
      // Predicated region
      $region21: #{tpu_custom_call.1} parent=5 // pred_check
        %p221 = pneg %p220
      $region22: #{tpu_custom_call.1} parent=5 // pred_check_branch
        %223 = sbr.rel (%p221) target = $region24
      $region23: #{tpu_custom_call.1} parent=5 // pred_region
        // Predicated region
        $region25: #{tpu_custom_call.1} parent=23 // pred_check
          %p224 = pneg %p56
        $region26: #{tpu_custom_call.1} parent=23 // pred_check_branch
          %226 = sbr.rel (%p224) target = $region28
        $region27: #{tpu_custom_call.1} parent=23 // pred_region
          %s227 = sand.u32 %s46, 1
          %s228 = scalar_lea.sflag [#allocation3], %s227
          %s229 = sand.u32 %s46, 1
          %s230 = smul.addr %s229, 8
          %s231 = scalar_lea.vmem [#allocation2], %s230
          %233 = vsyncadd %s228, 0
          %s234 = sadd.s32 %s30, %s29
          %s235 = smul.addr %s234, 8
          %s236 = scalar_lea.hbm %s0, %s235
          %s238 = sshll.u32 %s236, 4
          %s239 = int_to_ptr.hbm [resolvable:$true] %s238
          %s240 = sshll.u32 %s231, 4
          %s241 = int_to_ptr.vmem [resolvable:$true] %s240
          %243 = dma.hbm_to_vmem [thread:$0]  %s239, 128, %s241, %s228
        $region28: #{tpu_custom_call.1} parent=23 // pred_fallthru
          _
      $region24: #{tpu_custom_call.1} parent=5 // pred_fallthru
        _
      %p244 = scmp.le.s32.totalorder 1, %s22
      %p245 = scmp.lt.s32.totalorder %s22, 3
      %p246 = pnand %p244, %p245
      %p247 = pneg %p246
      // Predicated region
      $region29: #{tpu_custom_call.1} parent=5 // pred_check
        _
      $region30: #{tpu_custom_call.1} parent=5 // pred_check_branch
        %249 = sbr.rel (%p246) target = $region32
      $region31: #{tpu_custom_call.1} parent=5 // pred_region
        %s250 = ssub.s32 %s22, 1
        %s251 = sand.u32 %s49, 1
        %s252 = scalar_lea.sflag [#allocation3], %s251
        %s253 = sand.u32 %s49, 1
        %s254 = smul.addr %s253, 8
        %s255 = scalar_lea.vmem [#allocation2], %s254
        // Predicated region
        $region33: #{tpu_custom_call.1} parent=31 // pred_check
          %p256 = pneg %p62
        $region34: #{tpu_custom_call.1} parent=31 // pred_check_branch
          %258 = sbr.rel (%p256) target = $region36
        $region35: #{tpu_custom_call.1} parent=31 // pred_region
          %260 = dma.done %s252, 128
        $region36: #{tpu_custom_call.1} parent=31 // pred_fallthru
          _
        // Predicated region
        $region37: #{tpu_custom_call.1} parent=31 // pred_check
          %p261 = pneg %p83
        $region38: #{tpu_custom_call.1} parent=31 // pred_check_branch
          %263 = sbr.rel (%p261) target = $region40
        $region39: #{tpu_custom_call.1} parent=31 // pred_region
          %265 = dma.done [#allocation6], 512
        $region40: #{tpu_custom_call.1} parent=31 // pred_fallthru
          _
        %s266 = sand.u32 %s49, 1
        %s267 = scalar_lea.sflag [#allocation3], %s266
        %s268 = sand.u32 %s49, 1
        %s269 = smul.addr %s268, 8
        %s270 = scalar_lea.vmem [#allocation2], %s269
        %p271 = pneg %p62
        %p272 = pneg %p59
        %p273 = pneg %p83
        %p274 = pneg %p80
        %p275 = pneg %p104
        %p276 = pneg %p101
        %p277 = pneg %p132
        %p278 = pneg %p129
        %s279 = sand.u32 %s119, 1
        %s280 = scalar_lea.sflag [#allocation4], %s279
        %s281 = sand.u32 %s119, 1
        %s282 = smul.addr %s281, 8
        %s283 = scalar_lea.vmem [#allocation7], %s282
        %p284 = pneg %p160
        %p285 = pneg %p157
        %s286 = sand.u32 %s27, 1
        %s287 = scalar_lea.sflag [#allocation9], %s286
        %s288 = sand.u32 %s147, 1
        %s289 = smul.addr %s288, 8
        %s290 = scalar_lea.vmem [#allocation8], %s289
        %p291 = pneg %p188
        %p292 = pneg %p185
        %s293 = sand.u32 %s27, 1
        %s294 = scalar_lea.sflag [#allocation9], %s293
        %s295 = sand.u32 %s175, 1
        %s296 = smul.addr %s295, 8
        %s297 = scalar_lea.vmem [#allocation10], %s296
        %v298 = vld [vmem:[%s255] sm:$0xff]
        %v299 = vld [vmem:[#allocation5] sm:$0xff]
        %v300 = vld [vmem:[#allocation5 + $0x8] sm:$0xff]
        %v301 = vld [vmem:[#allocation5 + $0x10] sm:$0xff]
        %v302 = vld [vmem:[#allocation5 + $0x18] sm:$0xff]
        %v303 = vld [vmem:[%s2] sm:$0x1]
        %v305 = vperm.slane %v303, 0
        %vm307 = vcmask 261120
        %v309 = vsel %vm307, %v298, 0
        %311 = vmatpush.msra.mxu0 0.0
        %312 = vmatpush.msra.mxu0 0.0
        %313 = vmatpush.msra.mxu0 0.0
        %314 = vmatpush.msra.mxu0 0.0
        %315 = vmatpush.msra.mxu0 0.0
        %316 = vmatpush.msra.mxu0 0.0
        %317 = vmatpush.msra.mxu0 0.0
        %318 = vmatpush.msra.mxu0 0.0
        %319 = vmatpush.msra.mxu0 0.0
        %320 = vmatpush.msra.mxu0 0.0
        %321 = vmatpush.msra.mxu0 0.0
        %322 = vmatpush.msra.mxu0 0.0
        %323 = vmatpush.msra.mxu0 %v302
        %324 = vmatpush.msra.mxu0 %v301
        %325 = vmatpush.msra.mxu0 %v300
        %326 = vmatpush.msra.mxu0 %v299
        %327 = vmatmul.f32.gmra.mxu0 %v309
        %v328 = vpop.f32.mrf.mxu0
        %v329 = vadd.f32 %v305, %v328
        %330 = vdwg.mxu0
        %v331 = vmul.f32 %v329, 0.35355338
        %332 = vst.msk [vmem:[%s283] sm:$0xff] %vm307, %v331
        %334 = vrot.lane.b32.xlu0 %v329, 96
        %v335 = vpop.permute.xlu0 %334
        %337 = vst.msk [vmem:[%s290] sm:$0xff] %vm307, %v335
        %338 = vrot.lane.b32.xlu0 %v329, 64
        %v339 = vpop.permute.xlu0 %338
        %341 = vst.msk [vmem:[%s297] sm:$0xff] %vm307, %v339
        %s342 = sand.u32 %s119, 1
        %s343 = scalar_lea.sflag [#allocation4], %s342
        %s344 = sand.u32 %s119, 1
        %s345 = smul.addr %s344, 8
        %s346 = scalar_lea.vmem [#allocation7], %s345
        %s347 = sand.u32 %s27, 1
        %s348 = scalar_lea.sflag [#allocation9], %s347
        %s349 = sand.u32 %s147, 1
        %s350 = smul.addr %s349, 8
        %s351 = scalar_lea.vmem [#allocation8], %s350
        %s352 = sand.u32 %s27, 1
        %s353 = scalar_lea.sflag [#allocation9], %s352
        %s354 = sand.u32 %s175, 1
        %s355 = smul.addr %s354, 8
        %s356 = scalar_lea.vmem [#allocation10], %s355
        // Predicated region
        $region41: #{tpu_custom_call.1} parent=31 // pred_check
          %p357 = pneg %p129
        $region42: #{tpu_custom_call.1} parent=31 // pred_check_branch
          %359 = sbr.rel (%p357) target = $region44
        $region43: #{tpu_custom_call.1} parent=31 // pred_region
          %361 = vsyncadd %s343, 0
          %s362 = sadd.s32 %s32, %s31
          %s363 = smul.addr %s362, 8
          %s364 = scalar_lea.hbm %s3, %s363
          %s366 = sshll.u32 %s346, 4
          %s367 = int_to_ptr.vmem [resolvable:$true] %s366
          %s368 = sshll.u32 %s364, 4
          %s369 = int_to_ptr.hbm [resolvable:$true] %s368
          %371 = dma.vmem_to_hbm [thread:$0]  %s367, 128, %s369, %s343
        $region44: #{tpu_custom_call.1} parent=31 // pred_fallthru
          _
        // Predicated region
        $region45: #{tpu_custom_call.1} parent=31 // pred_check
          %p372 = pneg %p157
        $region46: #{tpu_custom_call.1} parent=31 // pred_check_branch
          %374 = sbr.rel (%p372) target = $region48
        $region47: #{tpu_custom_call.1} parent=31 // pred_region
          %376 = vsyncadd %s348, 0
          %s377 = sadd.s32 %s32, %s31
          %s378 = smul.addr %s377, 8
          %s379 = scalar_lea.hbm %s4, %s378
          %s381 = sshll.u32 %s351, 4
          %s382 = int_to_ptr.vmem [resolvable:$true] %s381
          %s383 = sshll.u32 %s379, 4
          %s384 = int_to_ptr.hbm [resolvable:$true] %s383
          %386 = dma.vmem_to_hbm [thread:$0]  %s382, 128, %s384, %s348
        $region48: #{tpu_custom_call.1} parent=31 // pred_fallthru
          _
        // Predicated region
        $region49: #{tpu_custom_call.1} parent=31 // pred_check
          %p387 = pneg %p185
        $region50: #{tpu_custom_call.1} parent=31 // pred_check_branch
          %389 = sbr.rel (%p387) target = $region52
        $region51: #{tpu_custom_call.1} parent=31 // pred_region
          %391 = vsyncadd %s353, 0
          %s392 = sadd.s32 %s32, %s31
          %s393 = smul.addr %s392, 8
          %s394 = scalar_lea.hbm %s5, %s393
          %s396 = sshll.u32 %s356, 4
          %s397 = int_to_ptr.vmem [resolvable:$true] %s396
          %s398 = sshll.u32 %s394, 4
          %s399 = int_to_ptr.hbm [resolvable:$true] %s398
          %401 = dma.vmem_to_hbm [thread:$0]  %s397, 128, %s399, %s353
        $region52: #{tpu_custom_call.1} parent=31 // pred_fallthru
          _
      $region32: #{tpu_custom_call.1} parent=5 // pred_fallthru
        _
      %p402 = scmp.le.s32.totalorder 2, %s22
      // Predicated region
      $region53: #{tpu_custom_call.1} parent=5 // pred_check
        %p403 = pneg %p402
      $region54: #{tpu_custom_call.1} parent=5 // pred_check_branch
        %405 = sbr.rel (%p403) target = $region56
      $region55: #{tpu_custom_call.1} parent=5 // pred_region
        %s406 = ssub.s32 %s22, 2
        // Predicated region
        $region57: #{tpu_custom_call.1} parent=55 // pred_check
          %p407 = pneg %p135
        $region58: #{tpu_custom_call.1} parent=55 // pred_check_branch
          %409 = sbr.rel (%p407) target = $region60
        $region59: #{tpu_custom_call.1} parent=55 // pred_region
          %s410 = sand.u32 %s120, 1
          %s411 = scalar_lea.sflag [#allocation4], %s410
          %s412 = sand.u32 %s120, 1
          %s413 = smul.addr %s412, 8
          %s414 = scalar_lea.vmem [#allocation7], %s413
          %416 = dma.done %s411, 128
        $region60: #{tpu_custom_call.1} parent=55 // pred_fallthru
          _
        // Predicated region
        $region61: #{tpu_custom_call.1} parent=55 // pred_check
          %p417 = pneg %p163
        $region62: #{tpu_custom_call.1} parent=55 // pred_check_branch
          %419 = sbr.rel (%p417) target = $region64
        $region63: #{tpu_custom_call.1} parent=55 // pred_region
          %s420 = sand.u32 %s28, 1
          %s421 = scalar_lea.sflag [#allocation9], %s420
          %s422 = sand.u32 %s148, 1
          %s423 = smul.addr %s422, 8
          %s424 = scalar_lea.vmem [#allocation8], %s423
          %426 = dma.done %s421, 128
        $region64: #{tpu_custom_call.1} parent=55 // pred_fallthru
          _
        // Predicated region
        $region65: #{tpu_custom_call.1} parent=55 // pred_check
          %p427 = pneg %p191
        $region66: #{tpu_custom_call.1} parent=55 // pred_check_branch
          %429 = sbr.rel (%p427) target = $region68
        $region67: #{tpu_custom_call.1} parent=55 // pred_region
          %s430 = sand.u32 %s28, 1
          %s431 = scalar_lea.sflag [#allocation9], %s430
          %s432 = sand.u32 %s176, 1
          %s433 = smul.addr %s432, 8
          %s434 = scalar_lea.vmem [#allocation10], %s433
          %436 = dma.done %s431, 128
        $region68: #{tpu_custom_call.1} parent=55 // pred_fallthru
          _
      $region56: #{tpu_custom_call.1} parent=5 // pred_fallthru
        _
    $region6: #{tpu_custom_call.1} parent=1 // loop_footer
      %s26 = sadd.s32 1, %s22
    $region7: #{tpu_custom_call.1} parent=1 // loop_footer_branch
      %21 = sbr.rel target = $region3
    $region8: #{tpu_custom_call.1} parent=1 // loop_exit
      _
    %437 = vsyncpa [#allocation3], 1
    %s438 = scalar_lea.sflag [#allocation3], 1
    %439 = vsyncpa %s438, 1
    %440 = vsyncpa [#allocation6], 1
    %441 = vsyncpa [#allocation4], 1
    %s442 = scalar_lea.sflag [#allocation4], 1
    %443 = vsyncpa %s442, 1
    %444 = vsyncpa [#allocation9], 1
    %s445 = scalar_lea.sflag [#allocation9], 1
    %446 = vsyncpa %s445, 1

// kernel: tpu_custom_call.1
$region0: #{tpu_custom_call.1}
  #allocation0 [shape = 'u32[]', space=smem, size = 0x4, offset = 0x4, fixed_abs, tag = 'smem constant byte address 0x4 - core index']
  #allocation1 [shape = 'u32[72,128]{1,0:T(1,128)}', space=vmem, size = 0x9000, scoped, tag = 'internal scratch']
  %s0 = inlined_call_operand.hbm [shape: f32[2,8,32], index: 0, kind: input, shape index: {}]
  %s1 = inlined_call_operand.hbm [shape: f32[32,96], index: 1, kind: input, shape index: {}]
  %s2 = inlined_call_operand.vmem [shape: f32[1,96], index: 2, kind: input, shape index: {}]
  %s3 = inlined_call_operand.hbm [shape: f32[2,8,32], index: 3, kind: output, shape index: {0}]
  %s4 = inlined_call_operand.hbm [shape: f32[2,8,32], index: 4, kind: output, shape index: {1}]
  %s5 = inlined_call_operand.hbm [shape: f32[2,8,32], index: 5, kind: output, shape index: {2}]
  %6 = xla_tuple %s3, %s4, %s5
  %s7 = sld [smem:[#allocation0]]
  $region69: #{tpu_custom_call.1} parent=0
    _
  %s9 = ssub.s32 1, %s7
  %s10 = scalar_select 0, %s9, %s7
  $region1: #{tpu_custom_call.1} parent=0
    #allocation2 [shape = 'u8[8192]{0}', space=vmem, size = 0x2000, scoped, tag = 'input window, operand 0']
    #allocation3 [shape = 's32[2]{0}', space=sflag, size = 0x8, scoped, tag = 'scoped memory for tpu_custom_call.1']
    #allocation4 [shape = 's32[2]{0}', space=sflag, size = 0x8, scoped, tag = 'scoped memory for tpu_custom_call.1']
    #allocation5 [shape = 'u8[16384]{0}', space=vmem, size = 0x4000, scoped, tag = 'input window, operand 1, single buffered']
    #allocation6 [shape = 's32[1]{0}', space=sflag, size = 0x4, scoped, tag = 'scoped memory for tpu_custom_call.1']
    #allocation7 [shape = 'u8[8192]{0}', space=vmem, size = 0x2000, scoped, tag = 'output window, operand 0']
    #allocation8 [shape = 'u8[8192]{0}', space=vmem, size = 0x2000, scoped, tag = 'output window, operand 1']
    #allocation9 [shape = 's32[2]{0}', space=sflag, size = 0x8, scoped, tag = 'scoped memory for tpu_custom_call.1']
    #allocation10 [shape = 'u8[8192]{0}', space=vmem, size = 0x2000, scoped, tag = 'output window, operand 2']
    %11 = vsyncpa [#allocation3], 0
    %s12 = scalar_lea.sflag [#allocation3], 1
    %13 = vsyncpa %s12, 0
    %14 = vsyncpa [#allocation6], 0
    %15 = vsyncpa [#allocation4], 0
    %s16 = scalar_lea.sflag [#allocation4], 1
    %17 = vsyncpa %s16, 0
    %18 = vsyncpa [#allocation9], 0
    %s19 = scalar_lea.sflag [#allocation9], 1
    %20 = vsyncpa %s19, 0
    loop: start=0, step=1, limit=4
    $region2: #{tpu_custom_call.1} parent=1 // loop_pre_header
      _
    $region3: #{tpu_custom_call.1} parent=1 // loop_header
      %s22 = sphi 0, %s26
      %p23 = scmp.ge.s32.totalorder %s22, 4
      %s29 = sphi 0, %s41
      %s30 = sphi 0, %s37
      %s31 = sphi 0, %s29
      %s32 = sphi 0, %s30
      %s33 = sphi 0, %s31
      %s34 = sphi 0, %s32
      %s46 = sphi 0, %s48
      %s49 = sphi 0, %s46
      %s50 = sphi 0, %s49
      %s66 = sphi 0, %s50
      %s70 = sphi 0, %s70
      %s72 = sphi 0, %s70
      %s73 = sphi 0, %s72
      %s87 = sphi 0, %s73
      %s91 = sphi 0, %s91
      %s93 = sphi 0, %s91
      %s94 = sphi 0, %s93
      %s108 = sphi 0, %s94
      %s116 = sphi 0, %s118
      %s119 = sphi 0, %s116
      %s120 = sphi 0, %s119
      %s136 = sphi 0, %s120
      %s144 = sphi 0, %s146
      %s147 = sphi 0, %s144
      %s148 = sphi 0, %s147
      %s164 = sphi 0, %s148
      %s172 = sphi 0, %s174
      %s175 = sphi 0, %s172
      %s176 = sphi 0, %s175
      %s192 = sphi 0, %s176
    $region4: #{tpu_custom_call.1} parent=1 // loop_header_branch
      %25 = sbr.rel (%p23) target = $region8
    $region5: #{tpu_custom_call.1} parent=1 // loop_body
      %s27 = ssub.s32 %s22, 1
      %s28 = ssub.s32 %s22, 2
      %s35 = sadd.s32 1, %s30
      %p36 = scmp.ge.s32.totalorder %s35, 1
      %s37 = scalar_select %p36, 0, %s35
      %s38 = sadd.s32 1, %s29
      %s39 = scalar_select %p36, %s38, %s29
      %p40 = scmp.ge.s32.totalorder %s39, 2
      %s41 = scalar_select %p40, 0, %s39
      %s42 = ssub.s32 %s29, %s41
      %s43 = ssub.s32 %s30, %s37
      %s44 = sor.u32 %s42, %s43
      %p45 = scmp.eq.s32.totalorder %s44, 0
      %s47 = sadd.s32 %s46, 1
      %s48 = scalar_select %p45, %s46, %s47
      %p51 = pneg %p45
      %p52 = scmp.eq.s32.totalorder %s22, 1
      %p53 = por %p51, %p52
      %p54 = scmp.ne.s32.totalorder %s46, %s49
      %p55 = scmp.eq.s32.totalorder %s22, 0
      %p56 = por %p54, %p55
      %p57 = scmp.ne.s32.totalorder %s46, %s49
      %p58 = scmp.eq.s32.totalorder %s27, 1
      %p59 = por %p57, %p58
      %p60 = scmp.ne.s32.totalorder %s49, %s50
      %p61 = scmp.eq.s32.totalorder %s27, 0
      %p62 = por %p60, %p61
      %p63 = scmp.ne.s32.totalorder %s49, %s50
      %p64 = scmp.eq.s32.totalorder %s28, 1
      %p65 = por %p63, %p64
      %p67 = scmp.ne.s32.totalorder %s50, %s66
      %p68 = scmp.eq.s32.totalorder %s28, 0
      %p69 = por %p67, %p68
      %s71 = sadd.s32 %s70, 1
      %p74 = scmp.eq.s32.totalorder %s22, 1
      %p75 = scmp.ne.s32.totalorder %s70, %s72
      %p76 = scmp.eq.s32.totalorder %s22, 0
      %p77 = por %p75, %p76
      %p78 = scmp.ne.s32.totalorder %s70, %s72
      %p79 = scmp.eq.s32.totalorder %s27, 1
      %p80 = por %p78, %p79
      %p81 = scmp.ne.s32.totalorder %s72, %s73
      %p82 = scmp.eq.s32.totalorder %s27, 0
      %p83 = por %p81, %p82
      %p84 = scmp.ne.s32.totalorder %s72, %s73
      %p85 = scmp.eq.s32.totalorder %s28, 1
      %p86 = por %p84, %p85
      %p88 = scmp.ne.s32.totalorder %s73, %s87
      %p89 = scmp.eq.s32.totalorder %s28, 0
      %p90 = por %p88, %p89
      %s92 = sadd.s32 %s91, 1
      %p95 = scmp.eq.s32.totalorder %s22, 1
      %p96 = scmp.ne.s32.totalorder %s91, %s93
      %p97 = scmp.eq.s32.totalorder %s22, 0
      %p98 = por %p96, %p97
      %p99 = scmp.ne.s32.totalorder %s91, %s93
      %p100 = scmp.eq.s32.totalorder %s27, 1
      %p101 = por %p99, %p100
      %p102 = scmp.ne.s32.totalorder %s93, %s94
      %p103 = scmp.eq.s32.totalorder %s27, 0
      %p104 = por %p102, %p103
      %p105 = scmp.ne.s32.totalorder %s93, %s94
      %p106 = scmp.eq.s32.totalorder %s28, 1
      %p107 = por %p105, %p106
      %p109 = scmp.ne.s32.totalorder %s94, %s108
      %p110 = scmp.eq.s32.totalorder %s28, 0
      %p111 = por %p109, %p110
      %s112 = ssub.s32 %s29, %s41
      %s113 = ssub.s32 %s30, %s37
      %s114 = sor.u32 %s112, %s113
      %p115 = scmp.eq.s32.totalorder %s114, 0
      %s117 = sadd.s32 %s116, 1
      %s118 = scalar_select %p115, %s116, %s117
      %p121 = pneg %p115
      %p122 = scmp.eq.s32.totalorder %s22, 1
      %p123 = por %p121, %p122
      %p124 = scmp.ne.s32.totalorder %s116, %s119
      %p125 = scmp.eq.s32.totalorder %s22, 0
      %p126 = por %p124, %p125
      %p127 = scmp.ne.s32.totalorder %s116, %s119
      %p128 = scmp.eq.s32.totalorder %s27, 1
      %p129 = por %p127, %p128
      %p130 = scmp.ne.s32.totalorder %s119, %s120
      %p131 = scmp.eq.s32.totalorder %s27, 0
      %p132 = por %p130, %p131
      %p133 = scmp.ne.s32.totalorder %s119, %s120
      %p134 = scmp.eq.s32.totalorder %s28, 1
      %p135 = por %p133, %p134
      %p137 = scmp.ne.s32.totalorder %s120, %s136
      %p138 = scmp.eq.s32.totalorder %s28, 0
      %p139 = por %p137, %p138
      %s140 = ssub.s32 %s29, %s41
      %s141 = ssub.s32 %s30, %s37
      %s142 = sor.u32 %s140, %s141
      %p143 = scmp.eq.s32.totalorder %s142, 0
      %s145 = sadd.s32 %s144, 1
      %s146 = scalar_select %p143, %s144, %s145
      %p149 = pneg %p143
      %p150 = scmp.eq.s32.totalorder %s22, 1
      %p151 = por %p149, %p150
      %p152 = scmp.ne.s32.totalorder %s144, %s147
      %p153 = scmp.eq.s32.totalorder %s22, 0
      %p154 = por %p152, %p153
      %p155 = scmp.ne.s32.totalorder %s144, %s147
      %p156 = scmp.eq.s32.totalorder %s27, 1
      %p157 = por %p155, %p156
      %p158 = scmp.ne.s32.totalorder %s147, %s148
      %p159 = scmp.eq.s32.totalorder %s27, 0
      %p160 = por %p158, %p159
      %p161 = scmp.ne.s32.totalorder %s147, %s148
      %p162 = scmp.eq.s32.totalorder %s28, 1
      %p163 = por %p161, %p162
      %p165 = scmp.ne.s32.totalorder %s148, %s164
      %p166 = scmp.eq.s32.totalorder %s28, 0
      %p167 = por %p165, %p166
      %s168 = ssub.s32 %s29, %s41
      %s169 = ssub.s32 %s30, %s37
      %s170 = sor.u32 %s168, %s169
      %p171 = scmp.eq.s32.totalorder %s170, 0
      %s173 = sadd.s32 %s172, 1
      %s174 = scalar_select %p171, %s172, %s173
      %p177 = pneg %p171
      %p178 = scmp.eq.s32.totalorder %s22, 1
      %p179 = por %p177, %p178
      %p180 = scmp.ne.s32.totalorder %s172, %s175
      %p181 = scmp.eq.s32.totalorder %s22, 0
      %p182 = por %p180, %p181
      %p183 = scmp.ne.s32.totalorder %s172, %s175
      %p184 = scmp.eq.s32.totalorder %s27, 1
      %p185 = por %p183, %p184
      %p186 = scmp.ne.s32.totalorder %s175, %s176
      %p187 = scmp.eq.s32.totalorder %s27, 0
      %p188 = por %p186, %p187
      %p189 = scmp.ne.s32.totalorder %s175, %s176
      %p190 = scmp.eq.s32.totalorder %s28, 1
      %p191 = por %p189, %p190
      %p193 = scmp.ne.s32.totalorder %s176, %s192
      %p194 = scmp.eq.s32.totalorder %s28, 0
      %p195 = por %p193, %p194
      %p196 = scmp.le.s32.totalorder 1, %s22
      %p197 = scmp.lt.s32.totalorder %s22, 3
      %p198 = pnand %p196, %p197
      %p199 = pneg %p198
      // Predicated region
      $region9: #{tpu_custom_call.1} parent=5 // pred_check
        _
      $region10: #{tpu_custom_call.1} parent=5 // pred_check_branch
        %201 = sbr.rel (%p198) target = $region12
      $region11: #{tpu_custom_call.1} parent=5 // pred_region
        %s202 = ssub.s32 %s22, 1
        // Predicated region
        $region13: #{tpu_custom_call.1} parent=11 // pred_check
          %p203 = pneg %p83
        $region14: #{tpu_custom_call.1} parent=11 // pred_check_branch
          %205 = sbr.rel (%p203) target = $region16
        $region15: #{tpu_custom_call.1} parent=11 // pred_region
          %207 = vsyncadd [#allocation6], 0
          %s208 = sshll.u32 %s1, 4
          %s209 = int_to_ptr.hbm [resolvable:$true] %s208
          %s210 = sshll.u32 [#allocation5], 4
          %s211 = int_to_ptr.vmem [resolvable:$true] %s210
          %216 = dma.hbm_to_vmem [thread:$0]  %s209, 512, %s211, [#allocation6], 128, 128, 8
        $region16: #{tpu_custom_call.1} parent=11 // pred_fallthru
          _
        // Predicated region
        $region17: #{tpu_custom_call.1} parent=11 // pred_check
          %p217 = pneg %p104
        $region18: #{tpu_custom_call.1} parent=11 // pred_check_branch
          %219 = sbr.rel (%p217) target = $region20
        $region19: #{tpu_custom_call.1} parent=11 // pred_region
          _
        $region20: #{tpu_custom_call.1} parent=11 // pred_fallthru
          _
      $region12: #{tpu_custom_call.1} parent=5 // pred_fallthru
        _
      %p220 = scmp.lt.s32.totalorder %s22, 2
      // Predicated region
      $region21: #{tpu_custom_call.1} parent=5 // pred_check
        %p221 = pneg %p220
      $region22: #{tpu_custom_call.1} parent=5 // pred_check_branch
        %223 = sbr.rel (%p221) target = $region24
      $region23: #{tpu_custom_call.1} parent=5 // pred_region
        // Predicated region
        $region25: #{tpu_custom_call.1} parent=23 // pred_check
          %p224 = pneg %p56
        $region26: #{tpu_custom_call.1} parent=23 // pred_check_branch
          %226 = sbr.rel (%p224) target = $region28
        $region27: #{tpu_custom_call.1} parent=23 // pred_region
          %s227 = sand.u32 %s46, 1
          %s228 = scalar_lea.sflag [#allocation3], %s227
          %s229 = sand.u32 %s46, 1
          %s230 = smul.addr %s229, 8
          %s231 = scalar_lea.vmem [#allocation2], %s230
          %233 = vsyncadd %s228, 0
          %s234 = sadd.s32 %s30, %s29
          %s235 = smul.addr %s234, 8
          %s236 = scalar_lea.hbm %s0, %s235
          %s238 = sshll.u32 %s236, 4
          %s239 = int_to_ptr.hbm [resolvable:$true] %s238
          %s240 = sshll.u32 %s231, 4
          %s241 = int_to_ptr.vmem [resolvable:$true] %s240
          %243 = dma.hbm_to_vmem [thread:$0]  %s239, 128, %s241, %s228
        $region28: #{tpu_custom_call.1} parent=23 // pred_fallthru
          _
      $region24: #{tpu_custom_call.1} parent=5 // pred_fallthru
        _
      %p244 = scmp.le.s32.totalorder 1, %s22
      %p245 = scmp.lt.s32.totalorder %s22, 3
      %p246 = pnand %p244, %p245
      %p247 = pneg %p246
      // Predicated region
      $region29: #{tpu_custom_call.1} parent=5 // pred_check
        _
      $region30: #{tpu_custom_call.1} parent=5 // pred_check_branch
        %249 = sbr.rel (%p246) target = $region32
      $region31: #{tpu_custom_call.1} parent=5 // pred_region
        %s250 = ssub.s32 %s22, 1
        %s251 = sand.u32 %s49, 1
        %s252 = scalar_lea.sflag [#allocation3], %s251
        %s253 = sand.u32 %s49, 1
        %s254 = smul.addr %s253, 8
        %s255 = scalar_lea.vmem [#allocation2], %s254
        // Predicated region
        $region33: #{tpu_custom_call.1} parent=31 // pred_check
          %p256 = pneg %p62
        $region34: #{tpu_custom_call.1} parent=31 // pred_check_branch
          %258 = sbr.rel (%p256) target = $region36
        $region35: #{tpu_custom_call.1} parent=31 // pred_region
          %260 = dma.done %s252, 128
        $region36: #{tpu_custom_call.1} parent=31 // pred_fallthru
          _
        // Predicated region
        $region37: #{tpu_custom_call.1} parent=31 // pred_check
          %p261 = pneg %p83
        $region38: #{tpu_custom_call.1} parent=31 // pred_check_branch
          %263 = sbr.rel (%p261) target = $region40
        $region39: #{tpu_custom_call.1} parent=31 // pred_region
          %265 = dma.done [#allocation6], 512
        $region40: #{tpu_custom_call.1} parent=31 // pred_fallthru
          _
        %s266 = sand.u32 %s49, 1
        %s267 = scalar_lea.sflag [#allocation3], %s266
        %s268 = sand.u32 %s49, 1
        %s269 = smul.addr %s268, 8
        %s270 = scalar_lea.vmem [#allocation2], %s269
        %p271 = pneg %p62
        %p272 = pneg %p59
        %p273 = pneg %p83
        %p274 = pneg %p80
        %p275 = pneg %p104
        %p276 = pneg %p101
        %p277 = pneg %p132
        %p278 = pneg %p129
        %s279 = sand.u32 %s119, 1
        %s280 = scalar_lea.sflag [#allocation4], %s279
        %s281 = sand.u32 %s119, 1
        %s282 = smul.addr %s281, 8
        %s283 = scalar_lea.vmem [#allocation7], %s282
        %p284 = pneg %p160
        %p285 = pneg %p157
        %s286 = sand.u32 %s27, 1
        %s287 = scalar_lea.sflag [#allocation9], %s286
        %s288 = sand.u32 %s147, 1
        %s289 = smul.addr %s288, 8
        %s290 = scalar_lea.vmem [#allocation8], %s289
        %p291 = pneg %p188
        %p292 = pneg %p185
        %s293 = sand.u32 %s27, 1
        %s294 = scalar_lea.sflag [#allocation9], %s293
        %s295 = sand.u32 %s175, 1
        %s296 = smul.addr %s295, 8
        %s297 = scalar_lea.vmem [#allocation10], %s296
        %v298 = vld [vmem:[%s255] sm:$0xff]
        %v299 = vld [vmem:[#allocation5] sm:$0xff]
        %v300 = vld [vmem:[#allocation5 + $0x8] sm:$0xff]
        %v301 = vld [vmem:[#allocation5 + $0x10] sm:$0xff]
        %v302 = vld [vmem:[#allocation5 + $0x18] sm:$0xff]
        %v303 = vld [vmem:[%s2] sm:$0x1]
        %v305 = vperm.slane %v303, 0
        %vm307 = vcmask 261120
        %v309 = vsel %vm307, %v298, 0
        %311 = vmatpush.msra.mxu0 0.0
        %312 = vmatpush.msra.mxu0 0.0
        %313 = vmatpush.msra.mxu0 0.0
        %314 = vmatpush.msra.mxu0 0.0
        %315 = vmatpush.msra.mxu0 0.0
        %316 = vmatpush.msra.mxu0 0.0
        %317 = vmatpush.msra.mxu0 0.0
        %318 = vmatpush.msra.mxu0 0.0
        %319 = vmatpush.msra.mxu0 0.0
        %320 = vmatpush.msra.mxu0 0.0
        %321 = vmatpush.msra.mxu0 0.0
        %322 = vmatpush.msra.mxu0 0.0
        %323 = vmatpush.msra.mxu0 %v302
        %324 = vmatpush.msra.mxu0 %v301
        %325 = vmatpush.msra.mxu0 %v300
        %326 = vmatpush.msra.mxu0 %v299
        %327 = vmatmul.f32.gmra.mxu0 %v309
        %v328 = vpop.f32.mrf.mxu0
        %v329 = vadd.f32 %v305, %v328
        %330 = vdwg.mxu0
        %v331 = vmul.f32 %v329, 0.35355338
        %332 = vst.msk [vmem:[%s283] sm:$0xff] %vm307, %v331
        %334 = vrot.lane.b32.xlu0 %v329, 96
        %v335 = vpop.permute.xlu0 %334
        %337 = vst.msk [vmem:[%s290] sm:$0xff] %vm307, %v335
        %338 = vrot.lane.b32.xlu0 %v329, 64
        %v339 = vpop.permute.xlu0 %338
        %341 = vst.msk [vmem:[%s297] sm:$0xff] %vm307, %v339
        %s342 = sand.u32 %s119, 1
        %s343 = scalar_lea.sflag [#allocation4], %s342
        %s344 = sand.u32 %s119, 1
        %s345 = smul.addr %s344, 8
        %s346 = scalar_lea.vmem [#allocation7], %s345
        %s347 = sand.u32 %s27, 1
        %s348 = scalar_lea.sflag [#allocation9], %s347
        %s349 = sand.u32 %s147, 1
        %s350 = smul.addr %s349, 8
        %s351 = scalar_lea.vmem [#allocation8], %s350
        %s352 = sand.u32 %s27, 1
        %s353 = scalar_lea.sflag [#allocation9], %s352
        %s354 = sand.u32 %s175, 1
        %s355 = smul.addr %s354, 8
        %s356 = scalar_lea.vmem [#allocation10], %s355
        // Predicated region
        $region41: #{tpu_custom_call.1} parent=31 // pred_check
          %p357 = pneg %p129
        $region42: #{tpu_custom_call.1} parent=31 // pred_check_branch
          %359 = sbr.rel (%p357) target = $region44
        $region43: #{tpu_custom_call.1} parent=31 // pred_region
          %361 = vsyncadd %s343, 0
          %s362 = sadd.s32 %s32, %s31
          %s363 = smul.addr %s362, 8
          %s364 = scalar_lea.hbm %s3, %s363
          %s366 = sshll.u32 %s346, 4
          %s367 = int_to_ptr.vmem [resolvable:$true] %s366
          %s368 = sshll.u32 %s364, 4
          %s369 = int_to_ptr.hbm [resolvable:$true] %s368
          %371 = dma.vmem_to_hbm [thread:$0]  %s367, 128, %s369, %s343
        $region44: #{tpu_custom_call.1} parent=31 // pred_fallthru
          _
        // Predicated region
        $region45: #{tpu_custom_call.1} parent=31 // pred_check
          %p372 = pneg %p157
        $region46: #{tpu_custom_call.1} parent=31 // pred_check_branch
          %374 = sbr.rel (%p372) target = $region48
        $region47: #{tpu_custom_call.1} parent=31 // pred_region
          %376 = vsyncadd %s348, 0
          %s377 = sadd.s32 %s32, %s31
          %s378 = smul.addr %s377, 8
          %s379 = scalar_lea.hbm %s4, %s378
          %s381 = sshll.u32 %s351, 4
          %s382 = int_to_ptr.vmem [resolvable:$true] %s381
          %s383 = sshll.u32 %s379, 4
          %s384 = int_to_ptr.hbm [resolvable:$true] %s383
          %386 = dma.vmem_to_hbm [thread:$0]  %s382, 128, %s384, %s348
        $region48: #{tpu_custom_call.1} parent=31 // pred_fallthru
          _
        // Predicated region
        $region49: #{tpu_custom_call.1} parent=31 // pred_check
          %p387 = pneg %p185
        $region50: #{tpu_custom_call.1} parent=31 // pred_check_branch
          %389 = sbr.rel (%p387) target = $region52
        $region51: #{tpu_custom_call.1} parent=31 // pred_region
          %391 = vsyncadd %s353, 0
          %s392 = sadd.s32 %s32, %s31
          %s393 = smul.addr %s392, 8
          %s394 = scalar_lea.hbm %s5, %s393
          %s396 = sshll.u32 %s356, 4
          %s397 = int_to_ptr.vmem [resolvable:$true] %s396
          %s398 = sshll.u32 %s394, 4
          %s399 = int_to_ptr.hbm [resolvable:$true] %s398
          %401 = dma.vmem_to_hbm [thread:$0]  %s397, 128, %s399, %s353
        $region52: #{tpu_custom_call.1} parent=31 // pred_fallthru
          _
      $region32: #{tpu_custom_call.1} parent=5 // pred_fallthru
        _
      %p402 = scmp.le.s32.totalorder 2, %s22
      // Predicated region
      $region53: #{tpu_custom_call.1} parent=5 // pred_check
        %p403 = pneg %p402
      $region54: #{tpu_custom_call.1} parent=5 // pred_check_branch
        %405 = sbr.rel (%p403) target = $region56
      $region55: #{tpu_custom_call.1} parent=5 // pred_region
        %s406 = ssub.s32 %s22, 2
        // Predicated region
        $region57: #{tpu_custom_call.1} parent=55 // pred_check
          %p407 = pneg %p135
        $region58: #{tpu_custom_call.1} parent=55 // pred_check_branch
          %409 = sbr.rel (%p407) target = $region60
        $region59: #{tpu_custom_call.1} parent=55 // pred_region
          %s410 = sand.u32 %s120, 1
          %s411 = scalar_lea.sflag [#allocation4], %s410
          %s412 = sand.u32 %s120, 1
          %s413 = smul.addr %s412, 8
          %s414 = scalar_lea.vmem [#allocation7], %s413
          %416 = dma.done %s411, 128
        $region60: #{tpu_custom_call.1} parent=55 // pred_fallthru
          _
        // Predicated region
        $region61: #{tpu_custom_call.1} parent=55 // pred_check
          %p417 = pneg %p163
        $region62: #{tpu_custom_call.1} parent=55 // pred_check_branch
          %419 = sbr.rel (%p417) target = $region64
        $region63: #{tpu_custom_call.1} parent=55 // pred_region
          %s420 = sand.u32 %s28, 1
          %s421 = scalar_lea.sflag [#allocation9], %s420
          %s422 = sand.u32 %s148, 1
          %s423 = smul.addr %s422, 8
          %s424 = scalar_lea.vmem [#allocation8], %s423
          %426 = dma.done %s421, 128
        $region64: #{tpu_custom_call.1} parent=55 // pred_fallthru
          _
        // Predicated region
        $region65: #{tpu_custom_call.1} parent=55 // pred_check
          %p427 = pneg %p191
        $region66: #{tpu_custom_call.1} parent=55 // pred_check_branch
          %429 = sbr.rel (%p427) target = $region68
        $region67: #{tpu_custom_call.1} parent=55 // pred_region
          %s430 = sand.u32 %s28, 1
          %s431 = scalar_lea.sflag [#allocation9], %s430
          %s432 = sand.u32 %s176, 1
          %s433 = smul.addr %s432, 8
          %s434 = scalar_lea.vmem [#allocation10], %s433
          %436 = dma.done %s431, 128
        $region68: #{tpu_custom_call.1} parent=55 // pred_fallthru
          _
      $region56: #{tpu_custom_call.1} parent=5 // pred_fallthru
        _
    $region6: #{tpu_custom_call.1} parent=1 // loop_footer
      %s26 = sadd.s32 1, %s22
    $region7: #{tpu_custom_call.1} parent=1 // loop_footer_branch
      %21 = sbr.rel target = $region3
    $region8: #{tpu_custom_call.1} parent=1 // loop_exit
      _
    %437 = vsyncpa [#allocation3], 1
    %s438 = scalar_lea.sflag [#allocation3], 1
    %439 = vsyncpa %s438, 1
    %440 = vsyncpa [#allocation6], 1
    %441 = vsyncpa [#allocation4], 1
    %s442 = scalar_lea.sflag [#allocation4], 1
    %443 = vsyncpa %s442, 1
    %444 = vsyncpa [#allocation9], 1
    %s445 = scalar_lea.sflag [#allocation9], 1
    %446 = vsyncpa %s445, 1

</llo_original>
